<compile_context>
chip_gen: v6e
topology: v6e:2x2x1
jax: 0.10.0
libtpu: 0.0.40
codegen_flags: <defaults>
</compile_context>

<pallas_src>
import functools

import numpy as np
import jax
import jax.numpy as jnp
from jax.experimental import pallas as pl
from jax.experimental.pallas import tpu as pltpu

_EPS = 1e-6  # torch.nn.PairwiseDistance default eps (added to the difference)


def _step_dist_kernel(x_ref, d_ref, *, p):
    """Per-row consecutive-step distance.

    x_ref: (R, D) tile of the row-flattened (B*T, D) input (original dtype).
    d_ref: (R, 1) f32 with d[r] = || x[r+1] - x[r] + eps ||_p.

    Row pairing uses a cyclic sublane roll, so the last row of each tile wraps onto the
    tile's first row; those rows are either dropped by the wrapper (t == T-1 rows) or
    patched there (block-boundary steps).  No masking in-kernel keeps the grid axis
    fully parallel (megacore friendly on v7x).
    """
    x = x_ref[...].astype(jnp.float32)            # cast in-kernel; bf16 stays bf16 in HBM
    nrows = x.shape[0]
    xs = pltpu.roll(x, shift=nrows - 1, axis=0)   # xs[r] = x[(r + 1) % nrows]  (XLU rotate; no
    diff = xs - x + _EPS                          #  sublane-misaligned slice copies)

    if p == 1:
        d = jnp.sum(jnp.abs(diff), axis=-1, keepdims=True)
    elif p == 2:
        d = jnp.sqrt(jnp.sum(diff * diff, axis=-1, keepdims=True))
    elif isinstance(p, int) and p > 2:
        # integer power via repeated VPU multiplies; the root only touches O(R) values (EUP)
        ad = jnp.abs(diff)
        pw = ad
        for _ in range(p - 1):
            pw = pw * ad
        d = jnp.sum(pw, axis=-1, keepdims=True) ** (1.0 / p)
    else:
        # generic (non-integer) p: exp/log over the full tile -- avoided by p normalization
        d = jnp.sum(jnp.abs(diff) ** float(p), axis=-1, keepdims=True) ** (1.0 / float(p))

    d_ref[...] = d


def _pnorm_rows(diff, p):
    """Plain-JAX p-norm over the last axis (used only for the tiny boundary-row patch)."""
    if p == 1:
        return jnp.sum(jnp.abs(diff), axis=-1)
    if p == 2:
        return jnp.sqrt(jnp.sum(diff * diff, axis=-1))
    return jnp.sum(jnp.abs(diff) ** float(p), axis=-1) ** (1.0 / float(p))


def _vmem_limit_bytes():
    """Generation-aware scoped-VMEM limit (v5e/v6e: 128 MiB physical, v7x: 64 MiB)."""
    cap = 128 * 1024 * 1024
    try:
        info = pltpu.get_tpu_info()
        cap = int(getattr(info, "vmem_capacity_bytes", cap)) or cap
    except Exception:
        pass
    # 96 MiB on 128-MiB parts, 48 MiB on 64-MiB v7x; never below 16 MiB.
    return max(min(3 * cap // 4, 96 * 1024 * 1024), 16 * 1024 * 1024)


def path_length(phis, norm_degree=2, *, max_block_rows=None):
    """JAX/Pallas equivalent of PathLength.forward (returns a scalar)."""
    assert phis.ndim == 3, "phis must be (B, T, D)"
    B, T, D = phis.shape
    assert T >= 2, "need at least 2 steps"

    # Normalize p so 2.0 / 3.0 etc. hit the integer VPU fast paths (review item).
    p = norm_degree
    if isinstance(p, np.integer):
        p = int(p)
    elif not isinstance(p, int):
        pf = float(p)
        p = int(pf) if pf.is_integer() else pf

    total = B * T
    x2d = phis.reshape(total, D)  # free reshape of a contiguous row-major array

    # ---- generation-aware tile sizing against the *total* VMEM working set ----
    vmem_limit = _vmem_limit_bytes()
    itemsize = jnp.dtype(phis.dtype).itemsize
    lanes = 128
    padded_d = ((D + lanes - 1) // lanes) * lanes      # minor dim pads to 128 lanes in VMEM
    # per-row bytes: 2x double-buffered input + ~6 f32 elementwise temporaries
    # (cast / rolled / diff / pow) + 2x lane-padded output tile.  Conservative on purpose.
    per_row = 2 * padded_d * itemsize + 6 * padded_d * 4 + 2 * lanes * 4
    budget = (vmem_limit * 6) // 10                    # leave compiler headroom under the limit
    cap_rows = max(8, int(budget // per_row))
    if max_block_rows is not None:
        cap_rows = min(cap_rows, max(8, int(max_block_rows)))

    if total <= cap_rows:
        block_rows = total                             # single block (tiny problems: no overhead)
    else:
        block_rows = max(8, (min(cap_rows, total) // 8) * 8)
    grid = pl.cdiv(total, block_rows)

    # Advisory cost for the XLA scheduler (bandwidth-bound custom call).
    flops = 6 * total * D
    transcendentals = 0 if p == 1 else (total if isinstance(p, int) else total * (D + 1))
    cost = pl.CostEstimate(
        flops=int(flops),
        transcendentals=int(transcendentals),
        bytes_accessed=int(total * D * itemsize + total * 4),
    )

    dists = pl.pallas_call(
        functools.partial(_step_dist_kernel, p=p),
        out_shape=jax.ShapeDtypeStruct((total, 1), jnp.float32),
        grid=(grid,),
        in_specs=[pl.BlockSpec((block_rows, D), lambda i: (i, 0))],
        out_specs=pl.BlockSpec((block_rows, 1), lambda i: (i, 0)),
        compiler_params=pltpu.CompilerParams(
            dimension_semantics=("parallel",),         # per-block outputs -> both TCs on v7x
            vmem_limit_bytes=int(vmem_limit),
        ),
        cost_estimate=cost,
    )(x2d)

    d = dists[:, 0]                                    # (B*T,) per-row step distances

    # Patch the (grid-1) block-boundary rows whose roll partner wrapped inside the tile.
    # O(grid * D) elements read via plain JAX -- negligible vs. the main pass.
    if grid > 1:
        bidx = np.arange(1, grid, dtype=np.int64) * block_rows - 1   # all < total, bidx+1 < total
        a = x2d[bidx + 1].astype(jnp.float32)
        b = x2d[bidx].astype(jnp.float32)
        d = d.at[bidx].set(_pnorm_rows(a - b + _EPS, p))

    # Drop the per-trajectory wrap rows (t == T-1), then mean over batch of the step sums.
    d = d.reshape(B, T)[:, : T - 1]
    return jnp.sum(d) / B


def _reference(phis, norm_degree=2):
    """Pure-JAX reference matching torch.nn.PairwiseDistance semantics."""
    x = phis.astype(jnp.float32)
    diff = x[:, 1:, :] - x[:, :-1, :] + _EPS
    dist = jnp.sum(jnp.abs(diff) ** norm_degree, axis=-1) ** (1.0 / norm_degree)  # (B, T-1)
    return jnp.mean(jnp.sum(dist, axis=-1))


if __name__ == "__main__":
    # PathLength has no learnable parameters; just build deterministic inputs.
    key = jax.random.PRNGKey(0)
    B, T, D = 2, 8, 32
    phis = jax.random.normal(key, (B, T, D), dtype=jnp.float32)

    # Default norm degree (p=2) plus the p=1 and integer p>2 fast paths.
    for p in (2, 1, 3):
        out = jax.block_until_ready(path_length(phis, norm_degree=p))
        ref = _reference(phis, norm_degree=p)
        assert jnp.allclose(out, ref, rtol=1e-4, atol=1e-5), (p, out, ref)

    # p normalization: 2.0 must hit the integer p=2 fast path and agree with it.
    out_f = jax.block_until_ready(path_length(phis, norm_degree=2.0))
    assert jnp.allclose(out_f, _reference(phis, 2), rtol=1e-4, atol=1e-5), out_f

    # bf16 input path (DMA'd as bf16, cast to f32 in-kernel).
    phis_bf16 = phis.astype(jnp.bfloat16)
    out_bf = jax.block_until_ready(path_length(phis_bf16, norm_degree=2))
    ref_bf = _reference(phis_bf16, norm_degree=2)
    assert jnp.allclose(out_bf, ref_bf, rtol=1e-3, atol=1e-3), (out_bf, ref_bf)

    # Multi-block path: force small row blocks NOT aligned to T so the parallel grid,
    # the partial last block, and the block-boundary patching are all exercised.
    B2, T2, D2 = 37, 16, 128
    phis2 = jax.random.normal(jax.random.PRNGKey(1), (B2, T2, D2), dtype=jnp.float32)
    out2 = jax.block_until_ready(path_length(phis2, norm_degree=2, max_block_rows=40))
    ref2 = _reference(phis2, norm_degree=2)
    assert jnp.allclose(out2, ref2, rtol=1e-4, atol=1e-4), (out2, ref2)

    print("KERNEL_OK")
</pallas_src>

<mosaic_0001>
module attributes {stable_mosaic.version = 11 : i64} {
  func.func @_step_dist_kernel(%arg0: i32, %arg1: memref<16x32xf32, #tpu.memory_space<vmem>>, %arg2: memref<16x1xf32, #tpu.memory_space<vmem>>) attributes {dimension_semantics = [#tpu.dimension_semantics<parallel>], iteration_bounds = array<i64: 1>, scalar_prefetch = 0 : i64, scratch_operands = 0 : i64, tpu.core_type = #tpu.core_type<tc>, window_params = [{transform_indices = @transform_0, window_bounds = array<i64: 16, 32>}, {transform_indices = @transform_1, window_bounds = array<i64: 16, 1>}]} {
    %c0 = arith.constant 0 : index
    %c0_0 = arith.constant 0 : index
    %0 = vector.load %arg1[%c0, %c0_0] : memref<16x32xf32, #tpu.memory_space<vmem>>, vector<16x32xf32>
    %c15_i32 = arith.constant 15 : i32
    %1 = tpu.dynamic_rotate %0 by %c15_i32 dim 0 : vector<16x32xf32>, i32 -> vector<16x32xf32>
    %2 = arith.subf %1, %0 : vector<16x32xf32>
    %cst = arith.constant 9.99999997E-7 : f32
    %3 = vector.broadcast %cst : f32 to vector<16x32xf32>
    %4 = arith.addf %2, %3 : vector<16x32xf32>
    %5 = arith.mulf %4, %4 : vector<16x32xf32>
    %cst_1 = arith.constant dense<0.000000e+00> : vector<16xf32>
    %6 = vector.multi_reduction <add>, %5, %cst_1 [1] : vector<16x32xf32> to vector<16xf32>
    %7 = vector.shape_cast %6 : vector<16xf32> to vector<16x1xf32>
    %8 = math.sqrt %7 : vector<16x1xf32>
    %c0_2 = arith.constant 0 : index
    %c0_3 = arith.constant 0 : index
    %9 = vector.load %arg2[%c0_2, %c0_3] : memref<16x1xf32, #tpu.memory_space<vmem>>, vector<16x1xf32>
    tpu.vector_store %arg2[%c0_2, %c0_3], %8 {strides = array<i32>} : memref<16x1xf32, #tpu.memory_space<vmem>>, vector<16x1xf32>,
    return
  }
  func.func @transform_0(%arg0: i32) -> (i32, i32) {
    %c0_i32 = arith.constant 0 : i32
    %c0_i32_0 = arith.constant 0 : i32
    return %arg0, %c0_i32 : i32, i32
  }
  func.func @transform_1(%arg0: i32) -> (i32, i32) {
    %c0_i32 = arith.constant 0 : i32
    %c0_i32_0 = arith.constant 0 : i32
    return %arg0, %c0_i32 : i32, i32
  }
}

</mosaic_0001>

<llo_original>
// kernel: tpu_custom_call.1
$region0: #{tpu_custom_call.1}
  #allocation0 [shape = 'u32[]', space=smem, size = 0x4, offset = 0x4, fixed_abs, tag = 'smem constant byte address 0x4 - core index']
  #allocation1 [shape = 'u32[144,128]{1,0:T(1,128)}', space=vmem, size = 0x12000, scoped, tag = 'internal scratch']
  %s0 = inlined_call_operand.hbm [shape: f32[16,32], index: 0, kind: input, shape index: {}]
  %s1 = inlined_call_operand.vmem [shape: f32[16,1], index: 1, kind: output, shape index: {}]
  %s2 = sld [smem:[#allocation0]]
  $region18: #{tpu_custom_call.1} parent=0
    _
  %s4 = ssub.s32 1, %s2
  %s5 = scalar_select 0, %s4, %s2
  $region1: #{tpu_custom_call.1} parent=0
    #allocation2 [shape = 'u8[8192]{0}', space=vmem, size = 0x2000, scoped, tag = 'input window, operand 0, single buffered']
    #allocation3 [shape = 's32[1]{0}', space=sflag, size = 0x4, scoped, tag = 'scoped memory for tpu_custom_call.1']
    %6 = vsyncpa [#allocation3], 0
    // Predicated region
    $region2: #{tpu_custom_call.1} parent=1 // pred_check
      _
    $region3: #{tpu_custom_call.1} parent=1 // pred_check_branch
      %8 = sbr.rel (0) target = $region5
    $region4: #{tpu_custom_call.1} parent=1 // pred_region
      %s10 = ssub.s32 256, 256
      %11 = vsyncadd [#allocation3], %s10
      %s12 = sshll.u32 [#allocation2], 4
      %s13 = int_to_ptr.vmem [resolvable:$true] %s12
      %18 = dma.hbm_to_vmem [thread:$0]  %s0, 256, %s13, [#allocation3], 128, 128, 8
    $region5: #{tpu_custom_call.1} parent=1 // pred_fallthru
      _
    // Predicated region
    $region6: #{tpu_custom_call.1} parent=1 // pred_check
      _
    $region7: #{tpu_custom_call.1} parent=1 // pred_check_branch
      %20 = sbr.rel (0) target = $region9
    $region8: #{tpu_custom_call.1} parent=1 // pred_region
      %21 = dma.done [#allocation3], 256
    $region9: #{tpu_custom_call.1} parent=1 // pred_fallthru
      _
    %v22 = vld [vmem:[#allocation2] sm:$0xff]
    %v23 = vld [vmem:[#allocation2 + $0x8] sm:$0xff]
    %v24 = vrot.slane %v22, 1
    %v25 = vrot.slane %v23, 1
    %v26 = vlaneseq
    %v27 = vshrl.u32 %v26, 7
    %vm28 = vcmp.lt.s32.totalorder %v27, 7
    %v29 = vsel %vm28, %v24, %v25
    %v30 = vsel %vm28, %v25, %v24
    %v31 = vsub.f32 %v29, %v22
    %v32 = vsub.f32 %v30, %v23
    %v33 = vadd.f32 %v31, 1e-06
    %v34 = vadd.f32 %v32, 1e-06
    %v35 = vmul.f32 %v33, %v33
    %v36 = vmul.f32 %v34, %v34
    %vm37 = vcmask 261120
    %v38 = vsel %vm37, %v35, 0.0
    %39 = vadd.xlane.f32.xlu0 %v38
    %v40 = vpop.xlane.xlu0 %39
    %v41 = vsel %vm37, %v36, 0.0
    %42 = vadd.xlane.f32.xlu0 %v41
    %v43 = vpop.xlane.xlu0 %42
    %v44 = vrsqrt.pop %v40
    %v45 = vmul.f32 %v40, %v44
    %vm46 = vcmp.eq.f32.partialorder %v40, inf
    %v47 = vsel %vm46, %v40, %v45
    %vm48 = vcmp.eq.f32.partialorder %v40, 0.0
    %v49 = vand.u32 %v40, 2147483648
    %v50 = vsel %vm48, %v49, %v47
    %v51 = vrsqrt.pop %v43
    %v52 = vmul.f32 %v43, %v51
    %vm53 = vcmp.eq.f32.partialorder %v43, inf
    %v54 = vsel %vm53, %v43, %v52
    %vm55 = vcmp.eq.f32.partialorder %v43, 0.0
    %v56 = vand.u32 %v43, 2147483648
    %v57 = vsel %vm55, %v56, %v54
    %vm58 = vcmask 7168
    %59 = vst.msk [vmem:[%s1] sm:$0xff] %vm58, %v50
    %60 = vst.msk [vmem:[%s1 + $0x8] sm:$0xff] %vm58, %v57
    // Predicated region
    $region10: #{tpu_custom_call.1} parent=1 // pred_check
      _
    $region11: #{tpu_custom_call.1} parent=1 // pred_check_branch
      %62 = sbr.rel (0) target = $region13
    $region12: #{tpu_custom_call.1} parent=1 // pred_region
      _
    $region13: #{tpu_custom_call.1} parent=1 // pred_fallthru
      _
    // Predicated region
    $region14: #{tpu_custom_call.1} parent=1 // pred_check
      _
    $region15: #{tpu_custom_call.1} parent=1 // pred_check_branch
      %64 = sbr.rel (0) target = $region17
    $region16: #{tpu_custom_call.1} parent=1 // pred_region
      _
    $region17: #{tpu_custom_call.1} parent=1 // pred_fallthru
      _
    %65 = vsyncpa [#allocation3], 1

</llo_original>
